<compile_context>
chip_gen: v7x
topology: tpu7x:2x2x1
jax: 0.10.0
libtpu: 0.0.40
codegen_flags: <defaults>
</compile_context>

<pallas_src>
import functools

import numpy as np
import jax
import jax.numpy as jnp
from jax.experimental import pallas as pl
from jax.experimental.pallas import tpu as pltpu

LANE = 128
SUBLANE = 8


def _q_sym_kernel(sc_ref, x_ref, o_ref, *, n_cand):
    """Elementwise multi-bitwidth symmetric quantization of one (T, 128) tile.

    sc_ref : (3*K,) float32 in SMEM, laid out as [inv_a_scaled | n_lv_m1 | scale]
             with inv_a_scaled[i] = (n_lv[i]-1)/a[i]
             and  scale[i]        = c[i] * softmask[i] / (n_lv[i]-1).
    x_ref  : (T, 128) input tile in VMEM (f32 or bf16).
    o_ref  : (T, 128) output tile in VMEM (same dtype as x_ref).
    """
    x = x_ref[...].astype(jnp.float32)
    acc = None
    for i in range(n_cand):  # K is small & static -> unrolled
        inv_a_scaled = sc_ref[i]
        bound = sc_ref[n_cand + i]          # n_lv - 1 (clip bound after folding)
        scale = sc_ref[2 * n_cand + i]
        # round(clip(x/a,-1,1)*(n-1)) / (n-1) * c * sm
        #   == round(clip(x*(n-1)/a, -(n-1), n-1)) * (c*sm/(n-1))
        xq = jnp.round(jnp.clip(x * inv_a_scaled, -bound, bound)) * scale
        acc = xq if acc is None else acc + xq
    o_ref[...] = acc.astype(o_ref.dtype)


@functools.lru_cache(maxsize=1)
def _is_v7x():
    """True on multi-TensorCore (v7x) chips; used only for tiling heuristics."""
    try:
        kind = str(jax.devices()[0].device_kind)
    except Exception:
        return False
    return "v7" in kind.lower()


def _pick_tile_rows(rows, target_rows, multicore):
    """rows = number of 128-lane rows in the bulk; returns the tile height."""
    if rows <= SUBLANE:
        return rows  # single block; block_shape == full array dims is allowed
    tile = min(target_rows, rows)
    tile = max(SUBLANE, (tile // SUBLANE) * SUBLANE)
    if multicore and -(-rows // tile) < 2:
        # v7x only: ensure >= 2 grid steps so both TensorCores get work via "parallel".
        half = -(-rows // 2)
        tile = max(SUBLANE, -(-half // SUBLANE) * SUBLANE)
    return tile


def _q_sym_dense_jax(xt, inv_a_scaled, n_lv_m1, scale):
    """Plain-JAX epilogue for the (<128-element) ragged tail; same folded math."""
    xt = xt.astype(jnp.float32)
    acc = jnp.zeros_like(xt)
    for i in range(inv_a_scaled.shape[0]):
        acc = acc + jnp.round(
            jnp.clip(xt * inv_a_scaled[i], -n_lv_m1[i], n_lv_m1[i])) * scale[i]
    return acc


def q_sym_forward(x, a_param, c_param, theta, bits, key, tau=1.0):
    """Pallas implementation of Q_Sym.forward after initialize()."""
    bits_list = [float(b) for b in bits]
    if len(bits_list) == 1 and bits_list[0] == 32.0:
        return x, 32  # un-initialized / fp32 passthrough branch

    bits_a = jnp.asarray(bits_list, jnp.float32)
    n_lv_m1 = 2.0 ** bits_a - 1.0
    K = len(bits_list)

    # grad_scale(x, g) has forward value == x, so it is dropped here (forward-only).
    # TODO(synk): no custom_vjp — STE backward of RoundQuant / grad_scale not reproduced.
    a = jax.nn.softplus(a_param.astype(jnp.float32))
    c = jax.nn.softplus(c_param.astype(jnp.float32))

    # F.gumbel_softmax(theta, tau=1, hard=False, dim=0) — sampled from `key`
    # (JAX PRNG; not bit-identical to torch's RNG, but same distribution/semantics).
    gumbels = jax.random.gumbel(key, theta.shape, dtype=jnp.float32)
    softmask = jax.nn.softmax((theta.astype(jnp.float32) + gumbels) / tau, axis=0)

    # Per-candidate scalars, folded so the kernel is mul/clip/round/mul/add only.
    inv_a_scaled = n_lv_m1 / a            # (n_lv-1)/a
    scale = c * softmask / n_lv_m1        # c * softmask / (n_lv-1)
    scalars = jnp.concatenate([inv_a_scaled, n_lv_m1, scale]).astype(jnp.float32)

    orig_shape = x.shape
    orig_dtype = x.dtype
    # Stream bf16 through HBM as bf16 (half the bytes); everything else as f32.
    io_dtype = jnp.bfloat16 if orig_dtype == jnp.bfloat16 else jnp.float32
    xf = x.reshape(-1).astype(io_dtype)
    numel = xf.shape[0]

    # 128-aligned bulk -> Pallas kernel (copy-free); <128-element tail -> plain JAX.
    bulk = (numel // LANE) * LANE
    rows = bulk // LANE

    pieces = []
    if rows > 0:
        x2d = (xf if bulk == numel else xf[:bulk]).reshape(rows, LANE)

        v7x = _is_v7x()
        target_rows = 4096 if v7x else 1024   # (rows,128) f32: 2 MiB / 512 KiB per buffer
        tile_rows = _pick_tile_rows(rows, target_rows, multicore=v7x)
        grid = (pl.cdiv(rows, tile_rows),)    # partial last block is masked by Pallas

        kernel = functools.partial(_q_sym_kernel, n_cand=K)
        out2d = pl.pallas_call(
            kernel,
            out_shape=jax.ShapeDtypeStruct((rows, LANE), io_dtype),
            grid=grid,
            in_specs=[
                pl.BlockSpec((3 * K,), lambda i: (0,), memory_space=pltpu.SMEM),  # scalars
                pl.BlockSpec((tile_rows, LANE), lambda i: (i, 0)),                # x tile
            ],
            out_specs=pl.BlockSpec((tile_rows, LANE), lambda i: (i, 0)),
            # TODO(synk): benchmark pltpu.CORE_PARALLEL vs "parallel" on v7x and confirm
            # in the trace that the grid axis is actually sharded across both TensorCores.
            compiler_params=pltpu.CompilerParams(dimension_semantics=("parallel",)),
        )(scalars, x2d)
        pieces.append(out2d.reshape(-1))

    if numel - bulk > 0:
        tail = xf[bulk:]
        pieces.append(_q_sym_dense_jax(tail, inv_a_scaled, n_lv_m1, scale).astype(io_dtype))

    x_bar = pieces[0] if len(pieces) == 1 else jnp.concatenate(pieces)
    x_bar = x_bar.reshape(orig_shape).astype(orig_dtype)
    act_size = jnp.sum(softmask * bits_a)  # tiny K-element reduction, kept in glue
    return x_bar, act_size


def q_sym_reference(x, a_param, c_param, theta, bits, key, tau=1.0):
    """Pure-JAX reference mirroring the PyTorch forward (for verification)."""
    bits_a = jnp.asarray([float(b) for b in bits], jnp.float32)
    n_lvs = 2.0 ** bits_a
    a = jax.nn.softplus(a_param.astype(jnp.float32))
    c = jax.nn.softplus(c_param.astype(jnp.float32))
    gumbels = jax.random.gumbel(key, theta.shape, dtype=jnp.float32)
    softmask = jax.nn.softmax((theta.astype(jnp.float32) + gumbels) / tau, axis=0)
    xf = x.astype(jnp.float32)
    x_bar = jnp.zeros_like(xf)
    for i in range(len(bits)):
        x_temp = jnp.clip(xf / a[i], -1.0, 1.0)
        x_q = jnp.round(x_temp * (n_lvs[i] - 1.0)) / (n_lvs[i] - 1.0)
        x_bar = x_bar + x_q * c[i] * softmask[i]
    return x_bar.astype(x.dtype), jnp.sum(softmask * bits_a)


if __name__ == "__main__":
    key = jax.random.PRNGKey(0)
    kx, kx2, kg = jax.random.split(key, 3)

    # Deterministic parameter init, mirroring Q_Sym.initialize(bits, offset, diff).
    bits = [2, 4, 8]
    offset, diff = 3.0, 0.5
    init_val = float(np.log(np.exp(offset + diff) - 1.0))
    K = len(bits)
    a_param = jnp.full((K,), init_val, dtype=jnp.float32)
    c_param = jnp.full((K,), init_val, dtype=jnp.float32)
    theta = jnp.ones((K,), dtype=jnp.float32) / K

    # Verification tolerance note: folding (n_lv-1) into 1/a is mathematically
    # identical to the torch formulation but a ~1-ulp rounding difference can in
    # principle flip a round-to-nearest tie for the 8-bit candidate (one level
    # step ~ c*softmask/255 ~ 5e-3), so atol covers a single-level flip.
    RTOL, ATOL = 2e-5, 8e-3

    # 1) Small NCHW activation (aligned path: 2048 elements, copy-free reshape).
    B, C, H, W = 2, 4, 16, 16
    x = jax.random.normal(kx, (B, C, H, W), dtype=jnp.float32)
    x_bar, act_size = q_sym_forward(x, a_param, c_param, theta, bits, kg)
    jax.block_until_ready((x_bar, act_size))
    x_bar_ref, act_size_ref = q_sym_reference(x, a_param, c_param, theta, bits, kg)
    np.testing.assert_allclose(np.asarray(x_bar), np.asarray(x_bar_ref), rtol=RTOL, atol=ATOL)
    np.testing.assert_allclose(float(act_size), float(act_size_ref), rtol=1e-5, atol=1e-5)

    # 2) Ragged shape (1938 elements): exercises the masked partial last block
    #    in the kernel plus the tiny plain-JAX tail (no pad / slice copies).
    xr = jax.random.normal(kx2, (2, 3, 17, 19), dtype=jnp.float32)
    xr_bar, r_act = q_sym_forward(xr, a_param, c_param, theta, bits, kg)
    jax.block_until_ready((xr_bar, r_act))
    xr_bar_ref, r_act_ref = q_sym_reference(xr, a_param, c_param, theta, bits, kg)
    np.testing.assert_allclose(np.asarray(xr_bar), np.asarray(xr_bar_ref), rtol=RTOL, atol=ATOL)
    np.testing.assert_allclose(float(r_act), float(r_act_ref), rtol=1e-5, atol=1e-5)

    print("KERNEL_OK")
</pallas_src>

<mosaic_0001>
module attributes {stable_mosaic.version = 11 : i64} {
  func.func @_q_sym_kernel(%arg0: i32, %arg1: memref<9xf32, #tpu.memory_space<smem>>, %arg2: memref<16x128xf32, #tpu.memory_space<vmem>>, %arg3: memref<16x128xf32, #tpu.memory_space<vmem>>) attributes {dimension_semantics = [#tpu.dimension_semantics<parallel>], iteration_bounds = array<i64: 1>, scalar_prefetch = 0 : i64, scratch_operands = 0 : i64, tpu.core_type = #tpu.core_type<tc>, window_params = [{transform_indices = @transform_0, window_bounds = array<i64: 9>}, {transform_indices = @transform_1, window_bounds = array<i64: 16, 128>}, {transform_indices = @transform_2, window_bounds = array<i64: 16, 128>}]} {
    %c0 = arith.constant 0 : index
    %c0_0 = arith.constant 0 : index
    %0 = vector.load %arg2[%c0, %c0_0] : memref<16x128xf32, #tpu.memory_space<vmem>>, vector<16x128xf32>
    %c0_1 = arith.constant 0 : index
    %1 = memref.load %arg1[%c0_1] : memref<9xf32, #tpu.memory_space<smem>>
    %c3 = arith.constant 3 : index
    %2 = memref.load %arg1[%c3] : memref<9xf32, #tpu.memory_space<smem>>
    %c6 = arith.constant 6 : index
    %3 = memref.load %arg1[%c6] : memref<9xf32, #tpu.memory_space<smem>>
    %4 = vector.broadcast %1 : f32 to vector<16x128xf32>
    %5 = arith.mulf %0, %4 : vector<16x128xf32>
    %cst = arith.constant 0.000000e+00 : f32
    %6 = arith.subf %cst, %2 : f32
    %7 = vector.broadcast %6 : f32 to vector<16x128xf32>
    %8 = arith.maximumf %7, %5 : vector<16x128xf32>
    %9 = vector.broadcast %2 : f32 to vector<16x128xf32>
    %10 = arith.minimumf %9, %8 : vector<16x128xf32>
    %11 = math.roundeven %10 : vector<16x128xf32>
    %12 = vector.broadcast %3 : f32 to vector<16x128xf32>
    %13 = arith.mulf %11, %12 : vector<16x128xf32>
    %c1 = arith.constant 1 : index
    %14 = memref.load %arg1[%c1] : memref<9xf32, #tpu.memory_space<smem>>
    %c4 = arith.constant 4 : index
    %15 = memref.load %arg1[%c4] : memref<9xf32, #tpu.memory_space<smem>>
    %c7 = arith.constant 7 : index
    %16 = memref.load %arg1[%c7] : memref<9xf32, #tpu.memory_space<smem>>
    %17 = vector.broadcast %14 : f32 to vector<16x128xf32>
    %18 = arith.mulf %0, %17 : vector<16x128xf32>
    %cst_2 = arith.constant 0.000000e+00 : f32
    %19 = arith.subf %cst_2, %15 : f32
    %20 = vector.broadcast %19 : f32 to vector<16x128xf32>
    %21 = arith.maximumf %20, %18 : vector<16x128xf32>
    %22 = vector.broadcast %15 : f32 to vector<16x128xf32>
    %23 = arith.minimumf %22, %21 : vector<16x128xf32>
    %24 = math.roundeven %23 : vector<16x128xf32>
    %25 = vector.broadcast %16 : f32 to vector<16x128xf32>
    %26 = arith.mulf %24, %25 : vector<16x128xf32>
    %27 = arith.addf %13, %26 : vector<16x128xf32>
    %c2 = arith.constant 2 : index
    %28 = memref.load %arg1[%c2] : memref<9xf32, #tpu.memory_space<smem>>
    %c5 = arith.constant 5 : index
    %29 = memref.load %arg1[%c5] : memref<9xf32, #tpu.memory_space<smem>>
    %c8 = arith.constant 8 : index
    %30 = memref.load %arg1[%c8] : memref<9xf32, #tpu.memory_space<smem>>
    %31 = vector.broadcast %28 : f32 to vector<16x128xf32>
    %32 = arith.mulf %0, %31 : vector<16x128xf32>
    %cst_3 = arith.constant 0.000000e+00 : f32
    %33 = arith.subf %cst_3, %29 : f32
    %34 = vector.broadcast %33 : f32 to vector<16x128xf32>
    %35 = arith.maximumf %34, %32 : vector<16x128xf32>
    %36 = vector.broadcast %29 : f32 to vector<16x128xf32>
    %37 = arith.minimumf %36, %35 : vector<16x128xf32>
    %38 = math.roundeven %37 : vector<16x128xf32>
    %39 = vector.broadcast %30 : f32 to vector<16x128xf32>
    %40 = arith.mulf %38, %39 : vector<16x128xf32>
    %41 = arith.addf %27, %40 : vector<16x128xf32>
    %c0_4 = arith.constant 0 : index
    %c0_5 = arith.constant 0 : index
    %42 = vector.load %arg3[%c0_4, %c0_5] : memref<16x128xf32, #tpu.memory_space<vmem>>, vector<16x128xf32>
    tpu.vector_store %arg3[%c0_4, %c0_5], %41 {strides = array<i32>} : memref<16x128xf32, #tpu.memory_space<vmem>>, vector<16x128xf32>,
    return
  }
  func.func @transform_0(%arg0: i32) -> i32 {
    %c0_i32 = arith.constant 0 : i32
    %c0_i32_0 = arith.constant 0 : i32
    return %c0_i32 : i32
  }
  func.func @transform_1(%arg0: i32) -> (i32, i32) {
    %c0_i32 = arith.constant 0 : i32
    %c0_i32_0 = arith.constant 0 : i32
    return %arg0, %c0_i32 : i32, i32
  }
  func.func @transform_2(%arg0: i32) -> (i32, i32) {
    %c0_i32 = arith.constant 0 : i32
    %c0_i32_0 = arith.constant 0 : i32
    return %arg0, %c0_i32 : i32, i32
  }
}

</mosaic_0001>

<llo_original>
// kernel: tpu_custom_call.1
$region0: #{tpu_custom_call.1}
  #allocation0 [shape = 'u32[]', space=smem, size = 0x4, offset = 0x4, fixed_abs, tag = 'smem constant byte address 0x4 - core index']
  #allocation1 [shape = 'u32[144,128]{1,0:T(1,128)}', space=vmem, size = 0x12000, scoped, tag = 'internal scratch']
  %s0 = inlined_call_operand.hbm [shape: f32[9], index: 0, kind: input, shape index: {}]
  %s1 = inlined_call_operand.hbm [shape: f32[16,128], index: 1, kind: input, shape index: {}]
  %s2 = inlined_call_operand.hbm [shape: f32[16,128], index: 2, kind: output, shape index: {}]
  %s3 = sld [smem:[#allocation0]]
  $region26: #{tpu_custom_call.1} parent=0
    _
  %s5 = ssub.s32 1, %s3
  %s6 = scalar_select 0, %s5, %s3
  $region1: #{tpu_custom_call.1} parent=0
    #allocation2 [shape = 'u8[512]{0}', space=smem, size = 0x200, scoped, tag = 'input window, operand 0, single buffered']
    #allocation3 [shape = 's32[1]{0}', space=sflag, size = 0x4, scoped, tag = 'scoped memory for tpu_custom_call.1']
    #allocation4 [shape = 's32[1]{0}', space=sflag, size = 0x4, scoped, tag = 'scoped memory for tpu_custom_call.1']
    #allocation5 [shape = 's32[1]{0}', space=sflag, size = 0x4, scoped, tag = 'scoped memory for tpu_custom_call.1']
    #allocation6 [shape = 'u8[8192]{0}', space=vmem, size = 0x2000, scoped, tag = 'input window, operand 1, single buffered']
    #allocation7 [shape = 'u8[8192]{0}', space=vmem, size = 0x2000, scoped, tag = 'output window, operand 0, single buffered']
    %7 = vsyncpa [#allocation5], 0
    %8 = vsyncpa [#allocation3], 0
    %9 = vsyncpa [#allocation4], 0
    // Predicated region
    $region2: #{tpu_custom_call.1} parent=1 // pred_check
      _
    $region3: #{tpu_custom_call.1} parent=1 // pred_check_branch
      %11 = sbr.rel (0) target = $region5
    $region4: #{tpu_custom_call.1} parent=1 // pred_region
      %s13 = ssub.s32 16, 16
      %14 = vsyncadd [#allocation5], %s13
      %17 = dma.hbm_to_smem %s0, 16, [#allocation2], [#allocation5]
    $region5: #{tpu_custom_call.1} parent=1 // pred_fallthru
      _
    // Predicated region
    $region6: #{tpu_custom_call.1} parent=1 // pred_check
      _
    $region7: #{tpu_custom_call.1} parent=1 // pred_check_branch
      %19 = sbr.rel (0) target = $region9
    $region8: #{tpu_custom_call.1} parent=1 // pred_region
      %s21 = ssub.s32 256, 256
      %22 = vsyncadd [#allocation3], %s21
      %s23 = sshll.u32 [#allocation6], 4
      %s24 = int_to_ptr.vmem [resolvable:$true] %s23
      %29 = dma.hbm_to_vmem [thread:$0]  %s1, 256, %s24, [#allocation3], 128, 128, 8
    $region9: #{tpu_custom_call.1} parent=1 // pred_fallthru
      _
    // Predicated region
    $region10: #{tpu_custom_call.1} parent=1 // pred_check
      _
    $region11: #{tpu_custom_call.1} parent=1 // pred_check_branch
      %31 = sbr.rel (0) target = $region13
    $region12: #{tpu_custom_call.1} parent=1 // pred_region
      %32 = dma.done [#allocation5], 16
    $region13: #{tpu_custom_call.1} parent=1 // pred_fallthru
      _
    // Predicated region
    $region14: #{tpu_custom_call.1} parent=1 // pred_check
      _
    $region15: #{tpu_custom_call.1} parent=1 // pred_check_branch
      %34 = sbr.rel (0) target = $region17
    $region16: #{tpu_custom_call.1} parent=1 // pred_region
      %35 = dma.done [#allocation3], 256
    $region17: #{tpu_custom_call.1} parent=1 // pred_fallthru
      _
    %36 = sfence
    %v37 = vld [vmem:[#allocation6] sm:$0xff]
    %v38 = vld [vmem:[#allocation6 + $0x8] sm:$0xff]
    %s39 = sld [smem:[#allocation2]]
    %s40 = sld [smem:[#allocation2 + $0x3]]
    %s41 = sld [smem:[#allocation2 + $0x6]]
    %v42 = vstv %s39
    %v43 = vmul.f32 %v37, %v42
    %v44 = vmul.f32 %v38, %v42
    %s45 = ssub.f32 0.0, %s40
    %v46 = vstv %s45
    %v47 = vmax.f32 %v46, %v43
    %v48 = vmax.f32 %v46, %v44
    %v49 = vstv %s40
    %v50 = vmin.f32 %v49, %v47
    %v51 = vmin.f32 %v49, %v48
    %v52 = vround.ne.pseudo %v50
    %v53 = vround.ne.pseudo %v51
    %v54 = vstv %s41
    %v55 = vmul.f32 %v52, %v54
    %v56 = vmul.f32 %v53, %v54
    %s57 = sld [smem:[#allocation2 + $0x1]]
    %s58 = sld [smem:[#allocation2 + $0x4]]
    %s59 = sld [smem:[#allocation2 + $0x7]]
    %v60 = vstv %s57
    %v61 = vmul.f32 %v37, %v60
    %v62 = vmul.f32 %v38, %v60
    %s63 = ssub.f32 0.0, %s58
    %v64 = vstv %s63
    %v65 = vmax.f32 %v64, %v61
    %v66 = vmax.f32 %v64, %v62
    %v67 = vstv %s58
    %v68 = vmin.f32 %v67, %v65
    %v69 = vmin.f32 %v67, %v66
    %v70 = vround.ne.pseudo %v68
    %v71 = vround.ne.pseudo %v69
    %v72 = vstv %s59
    %v73 = vmul.f32 %v70, %v72
    %v74 = vmul.f32 %v71, %v72
    %v75 = vadd.f32 %v55, %v73
    %v76 = vadd.f32 %v56, %v74
    %s77 = sld [smem:[#allocation2 + $0x2]]
    %s78 = sld [smem:[#allocation2 + $0x5]]
    %s79 = sld [smem:[#allocation2 + $0x8]]
    %v80 = vstv %s77
    %v81 = vmul.f32 %v37, %v80
    %v82 = vmul.f32 %v38, %v80
    %s83 = ssub.f32 0.0, %s78
    %v84 = vstv %s83
    %v85 = vmax.f32 %v84, %v81
    %v86 = vmax.f32 %v84, %v82
    %v87 = vstv %s78
    %v88 = vmin.f32 %v87, %v85
    %v89 = vmin.f32 %v87, %v86
    %v90 = vround.ne.pseudo %v88
    %v91 = vround.ne.pseudo %v89
    %v92 = vstv %s79
    %v93 = vmul.f32 %v90, %v92
    %v94 = vmul.f32 %v91, %v92
    %v95 = vadd.f32 %v75, %v93
    %v96 = vadd.f32 %v76, %v94
    %97 = vst [vmem:[#allocation7] sm:$0xff] %v95
    %98 = vst [vmem:[#allocation7 + $0x8] sm:$0xff] %v96
    // Predicated region
    $region18: #{tpu_custom_call.1} parent=1 // pred_check
      _
    $region19: #{tpu_custom_call.1} parent=1 // pred_check_branch
      %100 = sbr.rel (0) target = $region21
    $region20: #{tpu_custom_call.1} parent=1 // pred_region
      %s102 = ssub.s32 256, 256
      %103 = vsyncadd [#allocation4], %s102
      %s104 = sshll.u32 [#allocation7], 4
      %s105 = int_to_ptr.vmem [resolvable:$true] %s104
      %110 = dma.vmem_to_hbm [thread:$0]  %s105, 256, %s2, [#allocation4], 128, 128, 8
    $region21: #{tpu_custom_call.1} parent=1 // pred_fallthru
      _
    // Predicated region
    $region22: #{tpu_custom_call.1} parent=1 // pred_check
      _
    $region23: #{tpu_custom_call.1} parent=1 // pred_check_branch
      %112 = sbr.rel (0) target = $region25
    $region24: #{tpu_custom_call.1} parent=1 // pred_region
      %113 = dma.done [#allocation4], 256
    $region25: #{tpu_custom_call.1} parent=1 // pred_fallthru
      _
    %114 = vsyncpa [#allocation3], 1
    %115 = vsyncpa [#allocation4], 1
    %116 = vsyncpa [#allocation5], 1

</llo_original>
